<compile_context>
chip_gen: v5e
topology: v5e:2x2
jax: 0.10.0
libtpu: 0.0.40
codegen_flags: <defaults>
</compile_context>

<pallas_src>
import math
import numpy as np
import jax
import jax.numpy as jnp
from jax.experimental import pallas as pl
from jax.experimental.pallas import tpu as pltpu


# -------------------------------------------------------------------------
# Hardware-aware VMEM budgets (v5e/v6e: 128 MiB, v7x: 64 MiB per TensorCore)
# -------------------------------------------------------------------------
def _vmem_capacity_bytes():
    try:
        info = pltpu.get_tpu_info()
        cap = getattr(info, "vmem_capacity_bytes", None)
        if cap:
            return int(cap)
    except Exception:
        pass
    return 64 * 1024 * 1024            # conservative default (v7x per-core)


def _budgets():
    cap = _vmem_capacity_bytes()
    tile_budget = min(24 * 1024 * 1024, cap // 5)      # double-buffered block budget
    vmem_limit = min((cap * 3) // 4, 96 * 1024 * 1024)
    return tile_budget, vmem_limit


def make_kernel_np(k):
    k = np.asarray(k, dtype=np.float32)
    if k.ndim == 1:
        k = k[None, :] * k[:, None]
    k = k / k.sum()
    return k


# -------------------------------------------------------------------------
# Upsample 2x (upfirdn2d up=2, pad=(2,1)):  up = V2 @ skip @ Hm2
# (zero padding folded into the constant matrices -> no padded-skip round trip)
# -------------------------------------------------------------------------
def _make_upsample_mats(hs, ws, blur_kernel=(1, 3, 3, 1)):
    b = np.asarray(blur_kernel, np.float32)
    assert b.ndim == 1, "separable decomposition requires a 1-D blur kernel"
    g = b / b.sum() * 2.0               # [0.25, 0.75, 0.75, 0.25] for [1,3,3,1]
    g = g[::-1].copy()                  # conv flip (no-op for symmetric kernel)

    V = np.zeros((2 * hs, hs + 2), np.float32)
    r = np.arange(hs)
    V[2 * r, r] = g[0]
    V[2 * r, r + 1] = g[2]
    V[2 * r + 1, r + 1] = g[1]
    V[2 * r + 1, r + 2] = g[3]

    Hm = np.zeros((ws + 2, 2 * ws), np.float32)
    c = np.arange(ws)
    Hm[c, 2 * c] = g[0]
    Hm[c + 1, 2 * c] = g[2]
    Hm[c + 1, 2 * c + 1] = g[1]
    Hm[c + 2, 2 * c + 1] = g[3]

    # The zero-padded border rows/cols of the skip contribute nothing.
    return V[:, 1:hs + 1].copy(), Hm[1:ws + 1, :].copy()


def _pick_row_tile(h_out, c_out, hs, ws, out_itemsize, skip_itemsize, budget_bytes):
    """Largest row tile (divisor of h_out, multiple of 8) fitting the budget."""
    resident = c_out * hs * ws * skip_itemsize + 2 * ws * ws * 4      # skip + Hm2
    per_row = 2 * (c_out * 2 * ws * out_itemsize + hs * 4)            # out + V2 rows (x2 bufs)
    avail = max(budget_bytes - resident, 8 * per_row)
    cap = max(8, avail // per_row)
    if h_out <= cap or h_out % 8 != 0:
        return h_out
    best, t = 8, 8
    while t <= min(h_out, cap):
        if h_out % t == 0:
            best = t
        t += 8
    return best


def _upsample_kernel_factory(c_out):
    def kernel(v_ref, hm_ref, sp_ref, out_ref):
        v = v_ref[...]                               # (TH, Hs)   f32
        hm = hm_ref[...]                             # (Ws, 2Ws)  f32, resident
        for c in range(c_out):                       # C_out == 3: tiny static loop
            sp_c = sp_ref[0, c].astype(jnp.float32)  # (Hs, Ws)
            t = jnp.dot(v, sp_c, preferred_element_type=jnp.float32)   # (TH, Ws), f32
            out_ref[0, c] = jnp.dot(                                    # no bf16 round trip
                t, hm, preferred_element_type=jnp.float32).astype(out_ref.dtype)
    return kernel


def upsample2x(skip, blur_kernel=(1, 3, 3, 1), out_dtype=None,
               tile_budget=None, vmem_limit=None):
    """upfirdn2d(skip, make_kernel(blur)*4, up=2, down=1, pad=(2,1))."""
    B, C, hs, ws = skip.shape
    out_dt = jnp.dtype(out_dtype) if out_dtype is not None else skip.dtype
    if tile_budget is None or vmem_limit is None:
        tb, vl = _budgets()
        tile_budget = tile_budget or tb
        vmem_limit = vmem_limit or vl

    V2_np, Hm2_np = _make_upsample_mats(hs, ws, blur_kernel)
    V2 = jnp.asarray(V2_np)                      # (2Hs, Hs)  f32
    Hm2 = jnp.asarray(Hm2_np)                    # (Ws, 2Ws)  f32

    h_out, w_out = 2 * hs, 2 * ws
    th = _pick_row_tile(h_out, C, hs, ws, jnp.dtype(out_dt).itemsize,
                        skip.dtype.itemsize, tile_budget)
    n_t = h_out // th

    cost = pl.CostEstimate(
        flops=int(2 * B * C * (h_out * hs * ws + h_out * ws * w_out)),
        transcendentals=0,
        bytes_accessed=int(skip.size * skip.dtype.itemsize
                           + B * C * h_out * w_out * jnp.dtype(out_dt).itemsize
                           + V2.size * 4 + Hm2.size * 4),
    )

    return pl.pallas_call(
        _upsample_kernel_factory(C),
        out_shape=jax.ShapeDtypeStruct((B, C, h_out, w_out), out_dt),
        grid=(B, n_t),
        in_specs=[
            pl.BlockSpec((th, hs), lambda b, t: (t, 0)),                # V2 row band
            pl.BlockSpec((ws, w_out), lambda b, t: (0, 0)),             # Hm2 (resident)
            pl.BlockSpec((1, C, hs, ws), lambda b, t: (b, 0, 0, 0)),    # skip (resident per b)
        ],
        out_specs=pl.BlockSpec((1, C, th, w_out), lambda b, t: (b, 0, t, 0)),
        compiler_params=pltpu.CompilerParams(
            dimension_semantics=("parallel", "parallel"),
            vmem_limit_bytes=int(vmem_limit),
        ),
        cost_estimate=cost,
    )(V2, Hm2, skip)


# -------------------------------------------------------------------------
# Main ToRGB kernel: (C_out,C_in) @ (C_in, hw_tile) + bias (+ skip)
# -------------------------------------------------------------------------
def _torgb_kernel_factory(has_skip):
    def _matmul_bias(wmod_ref, bias_ref, x_ref):
        x = x_ref[0]                                     # (C_in, hw_tile), act dtype
        # Cast the tiny operand to the big operand's dtype (never upcast the x
        # tile): bf16 x -> native bf16 MXU with f32 accumulation.
        w = wmod_ref[0].astype(x.dtype)                  # (C_out, C_in)
        acc = jnp.dot(w, x, preferred_element_type=jnp.float32)
        return acc + bias_ref[...]                       # (C_out, 1) broadcast

    if has_skip:
        def kernel(wmod_ref, bias_ref, x_ref, skip_ref, out_ref):
            acc = _matmul_bias(wmod_ref, bias_ref, x_ref)
            acc = acc + skip_ref[0].astype(jnp.float32)
            out_ref[0] = acc.astype(out_ref.dtype)
    else:
        def kernel(wmod_ref, bias_ref, x_ref, out_ref):
            acc = _matmul_bias(wmod_ref, bias_ref, x_ref)
            out_ref[0] = acc.astype(out_ref.dtype)
    return kernel


def _pick_hw_tile(hw, per_lane_bytes, budget_bytes, want_min_steps=1):
    """Largest multiple-of-128 divisor of hw that keeps the double-buffered
    blocks under budget; optionally split further so the grid has at least
    `want_min_steps` spatial steps (keeps both v7x TensorCores busy at B==1)."""
    assert hw % 128 == 0
    cap = max(128, budget_bytes // max(per_lane_bytes, 1))
    best, t = 128, 128
    top = min(hw, cap)
    while t <= top:
        if hw % t == 0:
            best = t
        t += 128
    while (hw // best) < want_min_steps and best % 256 == 0:
        best //= 2
    return best


def to_rgb_forward(x, style, skip, params, blur_kernel=(1, 3, 3, 1),
                   compute_dtype=jnp.bfloat16, out_dtype=None):
    """ToRGB.forward(input, style, skip).

    compute_dtype: dtype used to stream activations / upsampled skip through HBM
      (bf16 by default -> ~2x less traffic on this memory-bound op; accumulation
      is always f32).  In a full model the producers already emit this dtype, so
      the casts below are free.
    out_dtype: output dtype, defaults to compute_dtype.
    params: conv_weight (C_out,C_in) [squeezed (1,C_out,C_in,1,1)],
            mod_weight (C_in,S), mod_bias (C_in,), bias (1,C_out,1,1).
    """
    B, C_in, H, W = x.shape
    S = style.shape[1]
    act_dt = jnp.dtype(compute_dtype)
    out_dt = jnp.dtype(out_dtype) if out_dtype is not None else act_dt
    tile_budget, vmem_limit = _budgets()

    conv_w = params["conv_weight"].astype(jnp.float32)          # (C_out, C_in)
    mod_w = params["mod_weight"].astype(jnp.float32)            # (C_in, S)
    mod_b = params["mod_bias"].astype(jnp.float32)              # (C_in,)
    bias = params["bias"].reshape(-1, 1).astype(jnp.float32)    # (C_out, 1)
    C_out = conv_w.shape[0]

    # Hoisted modulation (tiny): EqualLinear + weight modulation, scales folded.
    # Kept in f32 (B*C_out*C_in elements -> negligible HBM traffic).
    mod_scale = 1.0 / math.sqrt(S)          # EqualLinear scale (lr_mul = 1)
    conv_scale = 1.0 / math.sqrt(C_in)      # fan_in = C_in * 1 * 1
    style_mod = style.astype(jnp.float32) @ (mod_w * mod_scale).T + mod_b     # (B, C_in)
    w_mod = (conv_scale * conv_w)[None, :, :] * style_mod[:, None, :]         # (B, C_out, C_in)

    hw = H * W
    hw_p = ((hw + 127) // 128) * 128        # lane-dense stores; pad only if needed
    xf = x.reshape(B, C_in, hw).astype(act_dt)
    if hw_p != hw:
        xf = jnp.pad(xf, ((0, 0), (0, 0), (0, hw_p - hw)))

    has_skip = skip is not None
    act_isz = act_dt.itemsize
    out_isz = out_dt.itemsize
    per_lane = 2 * (C_in * act_isz + C_out * out_isz)   # double-buffered bytes / lane
    skip_bytes = 0

    in_specs = [
        pl.BlockSpec((1, C_out, C_in), lambda b, t: (b, 0, 0)),    # w_mod (resident per b)
        pl.BlockSpec((C_out, 1), lambda b, t: (0, 0)),             # conv bias (resident)
    ]
    args = [w_mod, bias]

    if has_skip:
        assert skip.shape == (B, C_out, H // 2, W // 2)
        skip_up = upsample2x(skip, blur_kernel, out_dtype=act_dt,
                             tile_budget=tile_budget, vmem_limit=vmem_limit)
        assert skip_up.shape == (B, C_out, H, W)
        skipf = skip_up.reshape(B, C_out, hw)                      # free reshape
        if hw_p != hw:
            skipf = jnp.pad(skipf, ((0, 0), (0, 0), (0, hw_p - hw)))
        per_lane += 2 * C_out * act_isz
        skip_bytes = skipf.size * act_isz

    hw_tile = _pick_hw_tile(hw_p, per_lane, tile_budget,
                            want_min_steps=2 if B == 1 else 1)
    n_hw = hw_p // hw_tile

    in_specs.append(pl.BlockSpec((1, C_in, hw_tile), lambda b, t: (b, 0, t)))      # x tile
    args.append(xf)
    if has_skip:
        in_specs.append(pl.BlockSpec((1, C_out, hw_tile), lambda b, t: (b, 0, t)))  # skip tile
        args.append(skipf)

    cost = pl.CostEstimate(
        flops=int(2 * B * C_out * C_in * hw_p),
        transcendentals=0,
        bytes_accessed=int(xf.size * act_isz + skip_bytes
                           + B * C_out * hw_p * out_isz + w_mod.size * 4),
    )

    outf = pl.pallas_call(
        _torgb_kernel_factory(has_skip),
        out_shape=jax.ShapeDtypeStruct((B, C_out, hw_p), out_dt),
        grid=(B, n_hw),
        in_specs=in_specs,
        out_specs=pl.BlockSpec((1, C_out, hw_tile), lambda b, t: (b, 0, t)),
        compiler_params=pltpu.CompilerParams(
            dimension_semantics=("parallel", "parallel"),
            vmem_limit_bytes=int(vmem_limit),
        ),
        cost_estimate=cost,
    )(*args)

    if hw_p != hw:
        outf = outf[:, :, :hw]
    return outf.reshape(B, C_out, H, W)


# -------------------------------------------------------------------------
# Pure-numpy reference (mirrors the PyTorch module exactly)
# -------------------------------------------------------------------------
def _upfirdn2d_ref_np(x, k, up, pad0, pad1):
    B, C, H, W = x.shape
    up_x = np.zeros((B, C, H * up, W * up), np.float32)
    up_x[:, :, ::up, ::up] = x
    p = np.pad(up_x, ((0, 0), (0, 0), (pad0, pad1), (pad0, pad1)))
    kf = k[::-1, ::-1]
    kh, kw = k.shape
    out_h = H * up + pad0 + pad1 - kh + 1
    out_w = W * up + pad0 + pad1 - kw + 1
    out = np.zeros((B, C, out_h, out_w), np.float32)
    for i in range(kh):
        for j in range(kw):
            out += kf[i, j] * p[:, :, i:i + out_h, j:j + out_w]
    return out


def _ref_forward_np(x, style, skip, conv_w, mod_w, mod_b, bias, blur_kernel=(1, 3, 3, 1)):
    x = np.asarray(x, np.float32)
    style = np.asarray(style, np.float32)
    conv_w = np.asarray(conv_w, np.float32)
    mod_w = np.asarray(mod_w, np.float32)
    mod_b = np.asarray(mod_b, np.float32)
    bias = np.asarray(bias, np.float32)
    B, C_in, H, W = x.shape
    S = style.shape[1]
    style_mod = style @ (mod_w * (1.0 / math.sqrt(S))).T + mod_b          # (B, C_in)
    w = (1.0 / math.sqrt(C_in)) * conv_w[None] * style_mod[:, None, :]    # (B, C_out, C_in)
    out = np.einsum("boc,bchw->bohw", w, x) + bias
    if skip is not None:
        k = make_kernel_np(blur_kernel) * 4.0
        out = out + _upfirdn2d_ref_np(np.asarray(skip, np.float32), k, 2, 2, 1)
    return out


if __name__ == "__main__":
    B, C_in, H, W = 2, 16, 16, 16
    S = 32            # style_dim
    C_out = 3         # im_channel
    Hs, Ws = H // 2, W // 2

    key = jax.random.PRNGKey(0)
    k1, k2, k3, k4, k5 = jax.random.split(key, 5)

    params = {
        "conv_weight": jax.random.normal(k1, (C_out, C_in), jnp.float32),   # (1,C_out,C_in,1,1) squeezed
        "mod_weight": jax.random.normal(k2, (C_in, S), jnp.float32),        # EqualLinear weight
        "mod_bias": jnp.ones((C_in,), jnp.float32),                         # bias_init = 1
        "bias": (0.1 * jnp.arange(C_out, dtype=jnp.float32) - 0.1).reshape(1, C_out, 1, 1),
    }

    x = jax.random.normal(k3, (B, C_in, H, W), jnp.float32)
    style = jax.random.normal(k4, (B, S), jnp.float32)
    skip = jax.random.normal(k5, (B, C_out, Hs, Ws), jnp.float32)

    ref = _ref_forward_np(x, style, skip, params["conv_weight"], params["mod_weight"],
                          params["mod_bias"], params["bias"])
    ref_ns = _ref_forward_np(x, style, None, params["conv_weight"], params["mod_weight"],
                             params["mod_bias"], params["bias"])

    # f32 streaming path with skip (tight check)
    out_f32 = jax.block_until_ready(
        to_rgb_forward(x, style, skip, params, compute_dtype=jnp.float32))
    assert out_f32.shape == (B, C_out, H, W) and out_f32.dtype == jnp.float32
    np.testing.assert_allclose(np.asarray(out_f32), ref, rtol=2e-3, atol=2e-3)

    # f32 streaming path without skip (dedicated kernel variant)
    out_ns = jax.block_until_ready(
        to_rgb_forward(x, style, None, params, compute_dtype=jnp.float32))
    np.testing.assert_allclose(np.asarray(out_ns), ref_ns, rtol=2e-3, atol=2e-3)

    # Default path: bf16 HBM traffic + bf16 output, f32 accumulation (loose check)
    out_bf = jax.block_until_ready(to_rgb_forward(x, style, skip, params))
    assert out_bf.shape == (B, C_out, H, W) and out_bf.dtype == jnp.bfloat16
    np.testing.assert_allclose(np.asarray(out_bf.astype(jnp.float32)), ref,
                               rtol=5e-2, atol=5e-2)

    print("KERNEL_OK")
</pallas_src>

<mosaic_0001>
module attributes {stable_mosaic.version = 11 : i64} {
  func.func @kernel(%arg0: i32, %arg1: i32, %arg2: memref<16x8xf32, #tpu.memory_space<vmem>>, %arg3: memref<8x16xf32, #tpu.memory_space<vmem>>, %arg4: memref<1x3x8x8xf32, #tpu.memory_space<vmem>>, %arg5: memref<1x3x16x16xf32, #tpu.memory_space<vmem>>) attributes {dimension_semantics = [#tpu.dimension_semantics<parallel>, #tpu.dimension_semantics<parallel>], iteration_bounds = array<i64: 2, 1>, scalar_prefetch = 0 : i64, scratch_operands = 0 : i64, tpu.core_type = #tpu.core_type<tc>, window_params = [{transform_indices = @transform_0, window_bounds = array<i64: 16, 8>}, {pipeline_mode = #tpu.pipeline_mode<synchronous>, transform_indices = @transform_1, window_bounds = array<i64: 8, 16>}, {transform_indices = @transform_2, window_bounds = array<i64: 1, 3, 8, 8>}, {transform_indices = @transform_3, window_bounds = array<i64: 1, 3, 16, 16>}]} {
    %c0 = arith.constant 0 : index
    %c0_0 = arith.constant 0 : index
    %0 = vector.load %arg2[%c0, %c0_0] : memref<16x8xf32, #tpu.memory_space<vmem>>, vector<16x8xf32>
    %c0_1 = arith.constant 0 : index
    %c0_2 = arith.constant 0 : index
    %1 = vector.load %arg3[%c0_1, %c0_2] : memref<8x16xf32, #tpu.memory_space<vmem>>, vector<8x16xf32>
    %c0_3 = arith.constant 0 : index
    %c0_4 = arith.constant 0 : index
    %c0_5 = arith.constant 0 : index
    %c0_6 = arith.constant 0 : index
    %2 = vector.load %arg4[%c0_3, %c0_4, %c0_5, %c0_6] : memref<1x3x8x8xf32, #tpu.memory_space<vmem>>, vector<1x1x8x8xf32>
    %3 = vector.shape_cast %2 : vector<1x1x8x8xf32> to vector<8x8xf32>
    %cst = arith.constant dense<0.000000e+00> : vector<16x8xf32>
    %4 = tpu.matmul %0, %3, %cst {dimension_numbers = #tpu.dot_dimension_numbers<[1], [0], [0], [1], [0, 0, 1, 1], [], []>} : vector<16x8xf32>, vector<8x8xf32>, vector<16x8xf32> -> vector<16x8xf32>
    %cst_7 = arith.constant dense<0.000000e+00> : vector<16x16xf32>
    %5 = tpu.matmul %4, %1, %cst_7 {dimension_numbers = #tpu.dot_dimension_numbers<[1], [0], [0], [1], [0, 0, 1, 1], [], []>} : vector<16x8xf32>, vector<8x16xf32>, vector<16x16xf32> -> vector<16x16xf32>
    %c0_8 = arith.constant 0 : index
    %c0_9 = arith.constant 0 : index
    %c0_10 = arith.constant 0 : index
    %c0_11 = arith.constant 0 : index
    %6 = vector.load %arg5[%c0_8, %c0_9, %c0_10, %c0_11] : memref<1x3x16x16xf32, #tpu.memory_space<vmem>>, vector<1x1x16x16xf32>
    %7 = vector.shape_cast %6 : vector<1x1x16x16xf32> to vector<16x16xf32>
    %8 = vector.shape_cast %5 : vector<16x16xf32> to vector<1x1x16x16xf32>
    tpu.vector_store %arg5[%c0_8, %c0_9, %c0_10, %c0_11], %8 {strides = array<i32>} : memref<1x3x16x16xf32, #tpu.memory_space<vmem>>, vector<1x1x16x16xf32>,
    %c0_12 = arith.constant 0 : index
    %c1 = arith.constant 1 : index
    %c0_13 = arith.constant 0 : index
    %c0_14 = arith.constant 0 : index
    %9 = vector.load %arg4[%c0_12, %c1, %c0_13, %c0_14] : memref<1x3x8x8xf32, #tpu.memory_space<vmem>>, vector<1x1x8x8xf32>
    %10 = vector.shape_cast %9 : vector<1x1x8x8xf32> to vector<8x8xf32>
    %cst_15 = arith.constant dense<0.000000e+00> : vector<16x8xf32>
    %11 = tpu.matmul %0, %10, %cst_15 {dimension_numbers = #tpu.dot_dimension_numbers<[1], [0], [0], [1], [0, 0, 1, 1], [], []>} : vector<16x8xf32>, vector<8x8xf32>, vector<16x8xf32> -> vector<16x8xf32>
    %cst_16 = arith.constant dense<0.000000e+00> : vector<16x16xf32>
    %12 = tpu.matmul %11, %1, %cst_16 {dimension_numbers = #tpu.dot_dimension_numbers<[1], [0], [0], [1], [0, 0, 1, 1], [], []>} : vector<16x8xf32>, vector<8x16xf32>, vector<16x16xf32> -> vector<16x16xf32>
    %c0_17 = arith.constant 0 : index
    %c1_18 = arith.constant 1 : index
    %c0_19 = arith.constant 0 : index
    %c0_20 = arith.constant 0 : index
    %13 = vector.load %arg5[%c0_17, %c1_18, %c0_19, %c0_20] : memref<1x3x16x16xf32, #tpu.memory_space<vmem>>, vector<1x1x16x16xf32>
    %14 = vector.shape_cast %13 : vector<1x1x16x16xf32> to vector<16x16xf32>
    %15 = vector.shape_cast %12 : vector<16x16xf32> to vector<1x1x16x16xf32>
    tpu.vector_store %arg5[%c0_17, %c1_18, %c0_19, %c0_20], %15 {strides = array<i32>} : memref<1x3x16x16xf32, #tpu.memory_space<vmem>>, vector<1x1x16x16xf32>,
    %c0_21 = arith.constant 0 : index
    %c2 = arith.constant 2 : index
    %c0_22 = arith.constant 0 : index
    %c0_23 = arith.constant 0 : index
    %16 = vector.load %arg4[%c0_21, %c2, %c0_22, %c0_23] : memref<1x3x8x8xf32, #tpu.memory_space<vmem>>, vector<1x1x8x8xf32>
    %17 = vector.shape_cast %16 : vector<1x1x8x8xf32> to vector<8x8xf32>
    %cst_24 = arith.constant dense<0.000000e+00> : vector<16x8xf32>
    %18 = tpu.matmul %0, %17, %cst_24 {dimension_numbers = #tpu.dot_dimension_numbers<[1], [0], [0], [1], [0, 0, 1, 1], [], []>} : vector<16x8xf32>, vector<8x8xf32>, vector<16x8xf32> -> vector<16x8xf32>
    %cst_25 = arith.constant dense<0.000000e+00> : vector<16x16xf32>
    %19 = tpu.matmul %18, %1, %cst_25 {dimension_numbers = #tpu.dot_dimension_numbers<[1], [0], [0], [1], [0, 0, 1, 1], [], []>} : vector<16x8xf32>, vector<8x16xf32>, vector<16x16xf32> -> vector<16x16xf32>
    %c0_26 = arith.constant 0 : index
    %c2_27 = arith.constant 2 : index
    %c0_28 = arith.constant 0 : index
    %c0_29 = arith.constant 0 : index
    %20 = vector.load %arg5[%c0_26, %c2_27, %c0_28, %c0_29] : memref<1x3x16x16xf32, #tpu.memory_space<vmem>>, vector<1x1x16x16xf32>
    %21 = vector.shape_cast %20 : vector<1x1x16x16xf32> to vector<16x16xf32>
    %22 = vector.shape_cast %19 : vector<16x16xf32> to vector<1x1x16x16xf32>
    tpu.vector_store %arg5[%c0_26, %c2_27, %c0_28, %c0_29], %22 {strides = array<i32>} : memref<1x3x16x16xf32, #tpu.memory_space<vmem>>, vector<1x1x16x16xf32>,
    return
  }
  func.func @transform_0(%arg0: i32, %arg1: i32) -> (i32, i32) {
    %c0_i32 = arith.constant 0 : i32
    %c0_i32_0 = arith.constant 0 : i32
    return %arg1, %c0_i32 : i32, i32
  }
  func.func @transform_1(%arg0: i32, %arg1: i32) -> (i32, i32) {
    %c0_i32 = arith.constant 0 : i32
    %c0_i32_0 = arith.constant 0 : i32
    %c0_i32_1 = arith.constant 0 : i32
    return %c0_i32, %c0_i32_0 : i32, i32
  }
  func.func @transform_2(%arg0: i32, %arg1: i32) -> (i32, i32, i32, i32) {
    %c0_i32 = arith.constant 0 : i32
    %c0_i32_0 = arith.constant 0 : i32
    %c0_i32_1 = arith.constant 0 : i32
    %c0_i32_2 = arith.constant 0 : i32
    return %arg0, %c0_i32, %c0_i32_0, %c0_i32_1 : i32, i32, i32, i32
  }
  func.func @transform_3(%arg0: i32, %arg1: i32) -> (i32, i32, i32, i32) {
    %c0_i32 = arith.constant 0 : i32
    %c0_i32_0 = arith.constant 0 : i32
    %c0_i32_1 = arith.constant 0 : i32
    return %arg0, %c0_i32, %arg1, %c0_i32_0 : i32, i32, i32, i32
  }
}

</mosaic_0001>

<llo_original>
// kernel: tpu_custom_call.1
$region0: #{tpu_custom_call.1}
  #allocation0 [shape = 'u32[]', space=smem, size = 0x4, offset = 0x4, fixed_abs, tag = 'smem constant byte address 0x4 - core index']
  #allocation1 [shape = 'u32[72,128]{1,0:T(1,128)}', space=vmem, size = 0x9000, scoped, tag = 'internal scratch']
  %s0 = inlined_call_operand.vmem [shape: f32[16,8], index: 0, kind: input, shape index: {}]
  %s1 = inlined_call_operand.vmem [shape: f32[8,16], index: 1, kind: input, shape index: {}]
  %s2 = inlined_call_operand.hbm [shape: f32[2,3,8,8], index: 2, kind: input, shape index: {}]
  %s3 = inlined_call_operand.hbm [shape: f32[2,3,16,16], index: 3, kind: output, shape index: {}]
  %s4 = sld [smem:[#allocation0]]
  $region49: #{tpu_custom_call.1} parent=0
    _
  %s6 = ssub.s32 1, %s4
  %s7 = scalar_select 0, %s6, %s4
  $region1: #{tpu_custom_call.1} parent=0
    #allocation2 [shape = 'u8[24576]{0}', space=vmem, size = 0x6000, scoped, tag = 'input window, operand 2']
    #allocation3 [shape = 's32[2]{0}', space=sflag, size = 0x8, scoped, tag = 'scoped memory for tpu_custom_call.1']
    #allocation4 [shape = 's32[2]{0}', space=sflag, size = 0x8, scoped, tag = 'scoped memory for tpu_custom_call.1']
    #allocation5 [shape = 'u8[49152]{0}', space=vmem, size = 0xc000, scoped, tag = 'output window, operand 0']
    %8 = vsyncpa [#allocation3], 0
    %s9 = scalar_lea.sflag [#allocation3], 1
    %10 = vsyncpa %s9, 0
    %11 = vsyncpa [#allocation4], 0
    %s12 = scalar_lea.sflag [#allocation4], 1
    %13 = vsyncpa %s12, 0
    loop: start=0, step=1, limit=4
    $region2: #{tpu_custom_call.1} parent=1 // loop_pre_header
      _
    $region3: #{tpu_custom_call.1} parent=1 // loop_header
      %s15 = sphi 0, %s19
      %p16 = scmp.ge.s32.totalorder %s15, 4
      %s22 = sphi 0, %s34
      %s23 = sphi 0, %s30
      %s24 = sphi 0, %s22
      %s25 = sphi 0, %s23
      %s26 = sphi 0, %s24
      %s27 = sphi 0, %s25
      %s37 = sphi 0, %s39
      %s40 = sphi 0, %s37
      %s41 = sphi 0, %s40
      %s57 = sphi 0, %s41
      %s61 = sphi 0, %s61
      %s63 = sphi 0, %s61
      %s64 = sphi 0, %s63
      %s78 = sphi 0, %s64
      %s84 = sphi 0, %s86
      %s87 = sphi 0, %s84
      %s88 = sphi 0, %s87
      %s104 = sphi 0, %s88
      %s112 = sphi 0, %s114
      %s115 = sphi 0, %s112
      %s116 = sphi 0, %s115
      %s132 = sphi 0, %s116
    $region4: #{tpu_custom_call.1} parent=1 // loop_header_branch
      %18 = sbr.rel (%p16) target = $region8
    $region5: #{tpu_custom_call.1} parent=1 // loop_body
      %s20 = ssub.s32 %s15, 1
      %s21 = ssub.s32 %s15, 2
      %s28 = sadd.s32 1, %s23
      %p29 = scmp.ge.s32.totalorder %s28, 1
      %s30 = scalar_select %p29, 0, %s28
      %s31 = sadd.s32 1, %s22
      %s32 = scalar_select %p29, %s31, %s22
      %p33 = scmp.ge.s32.totalorder %s32, 2
      %s34 = scalar_select %p33, 0, %s32
      %s35 = ssub.s32 %s23, %s30
      %p36 = scmp.eq.s32.totalorder %s35, 0
      %s38 = sadd.s32 %s37, 1
      %s39 = scalar_select %p36, %s37, %s38
      %p42 = pneg %p36
      %p43 = scmp.eq.s32.totalorder %s15, 1
      %p44 = por %p42, %p43
      %p45 = scmp.ne.s32.totalorder %s37, %s40
      %p46 = scmp.eq.s32.totalorder %s15, 0
      %p47 = por %p45, %p46
      %p48 = scmp.ne.s32.totalorder %s37, %s40
      %p49 = scmp.eq.s32.totalorder %s20, 1
      %p50 = por %p48, %p49
      %p51 = scmp.ne.s32.totalorder %s40, %s41
      %p52 = scmp.eq.s32.totalorder %s20, 0
      %p53 = por %p51, %p52
      %p54 = scmp.ne.s32.totalorder %s40, %s41
      %p55 = scmp.eq.s32.totalorder %s21, 1
      %p56 = por %p54, %p55
      %p58 = scmp.ne.s32.totalorder %s41, %s57
      %p59 = scmp.eq.s32.totalorder %s21, 0
      %p60 = por %p58, %p59
      %s62 = sadd.s32 %s61, 1
      %p65 = scmp.eq.s32.totalorder %s15, 1
      %p66 = scmp.ne.s32.totalorder %s61, %s63
      %p67 = scmp.eq.s32.totalorder %s15, 0
      %p68 = por %p66, %p67
      %p69 = scmp.ne.s32.totalorder %s61, %s63
      %p70 = scmp.eq.s32.totalorder %s20, 1
      %p71 = por %p69, %p70
      %p72 = scmp.ne.s32.totalorder %s63, %s64
      %p73 = scmp.eq.s32.totalorder %s20, 0
      %p74 = por %p72, %p73
      %p75 = scmp.ne.s32.totalorder %s63, %s64
      %p76 = scmp.eq.s32.totalorder %s21, 1
      %p77 = por %p75, %p76
      %p79 = scmp.ne.s32.totalorder %s64, %s78
      %p80 = scmp.eq.s32.totalorder %s21, 0
      %p81 = por %p79, %p80
      %s82 = ssub.s32 %s22, %s34
      %p83 = scmp.eq.s32.totalorder %s82, 0
      %s85 = sadd.s32 %s84, 1
      %s86 = scalar_select %p83, %s84, %s85
      %p89 = pneg %p83
      %p90 = scmp.eq.s32.totalorder %s15, 1
      %p91 = por %p89, %p90
      %p92 = scmp.ne.s32.totalorder %s84, %s87
      %p93 = scmp.eq.s32.totalorder %s15, 0
      %p94 = por %p92, %p93
      %p95 = scmp.ne.s32.totalorder %s84, %s87
      %p96 = scmp.eq.s32.totalorder %s20, 1
      %p97 = por %p95, %p96
      %p98 = scmp.ne.s32.totalorder %s87, %s88
      %p99 = scmp.eq.s32.totalorder %s20, 0
      %p100 = por %p98, %p99
      %p101 = scmp.ne.s32.totalorder %s87, %s88
      %p102 = scmp.eq.s32.totalorder %s21, 1
      %p103 = por %p101, %p102
      %p105 = scmp.ne.s32.totalorder %s88, %s104
      %p106 = scmp.eq.s32.totalorder %s21, 0
      %p107 = por %p105, %p106
      %s108 = ssub.s32 %s22, %s34
      %s109 = ssub.s32 %s23, %s30
      %s110 = sor.u32 %s108, %s109
      %p111 = scmp.eq.s32.totalorder %s110, 0
      %s113 = sadd.s32 %s112, 1
      %s114 = scalar_select %p111, %s112, %s113
      %p117 = pneg %p111
      %p118 = scmp.eq.s32.totalorder %s15, 1
      %p119 = por %p117, %p118
      %p120 = scmp.ne.s32.totalorder %s112, %s115
      %p121 = scmp.eq.s32.totalorder %s15, 0
      %p122 = por %p120, %p121
      %p123 = scmp.ne.s32.totalorder %s112, %s115
      %p124 = scmp.eq.s32.totalorder %s20, 1
      %p125 = por %p123, %p124
      %p126 = scmp.ne.s32.totalorder %s115, %s116
      %p127 = scmp.eq.s32.totalorder %s20, 0
      %p128 = por %p126, %p127
      %p129 = scmp.ne.s32.totalorder %s115, %s116
      %p130 = scmp.eq.s32.totalorder %s21, 1
      %p131 = por %p129, %p130
      %p133 = scmp.ne.s32.totalorder %s116, %s132
      %p134 = scmp.eq.s32.totalorder %s21, 0
      %p135 = por %p133, %p134
      %p136 = scmp.le.s32.totalorder 1, %s15
      %p137 = scmp.lt.s32.totalorder %s15, 3
      %p138 = pnand %p136, %p137
      %p139 = pneg %p138
      // Predicated region
      $region9: #{tpu_custom_call.1} parent=5 // pred_check
        _
      $region10: #{tpu_custom_call.1} parent=5 // pred_check_branch
        %141 = sbr.rel (%p138) target = $region12
      $region11: #{tpu_custom_call.1} parent=5 // pred_region
        %s142 = ssub.s32 %s15, 1
        // Predicated region
        $region13: #{tpu_custom_call.1} parent=11 // pred_check
          %p143 = pneg %p53
        $region14: #{tpu_custom_call.1} parent=11 // pred_check_branch
          %145 = sbr.rel (%p143) target = $region16
        $region15: #{tpu_custom_call.1} parent=11 // pred_region
          %s146 = smul.u32 2, %s25
          %p147 = scmp.lt.s32.totalorder %s146, 1
          %s148 = scalar_select %p147, %s146, 1
          %s149 = smul.addr %s148, 8
          %s150 = scalar_lea.vmem %s0, %s149
          %s151 = smul.u32 2, %s25
        $region16: #{tpu_custom_call.1} parent=11 // pred_fallthru
          _
        // Predicated region
        $region17: #{tpu_custom_call.1} parent=11 // pred_check
          %p152 = pneg %p74
        $region18: #{tpu_custom_call.1} parent=11 // pred_check_branch
          %154 = sbr.rel (%p152) target = $region20
        $region19: #{tpu_custom_call.1} parent=11 // pred_region
          _
        $region20: #{tpu_custom_call.1} parent=11 // pred_fallthru
          _
      $region12: #{tpu_custom_call.1} parent=5 // pred_fallthru
        _
      %p155 = scmp.lt.s32.totalorder %s15, 2
      // Predicated region
      $region21: #{tpu_custom_call.1} parent=5 // pred_check
        %p156 = pneg %p155
      $region22: #{tpu_custom_call.1} parent=5 // pred_check_branch
        %158 = sbr.rel (%p156) target = $region24
      $region23: #{tpu_custom_call.1} parent=5 // pred_region
        // Predicated region
        $region25: #{tpu_custom_call.1} parent=23 // pred_check
          %p159 = pneg %p94
        $region26: #{tpu_custom_call.1} parent=23 // pred_check_branch
          %161 = sbr.rel (%p159) target = $region28
        $region27: #{tpu_custom_call.1} parent=23 // pred_region
          %s162 = sand.u32 %s84, 1
          %s163 = scalar_lea.sflag [#allocation3], %s162
          %s164 = sand.u32 %s84, 1
          %s165 = smul.addr %s164, 24
          %s166 = scalar_lea.vmem [#allocation2], %s165
          %168 = vsyncadd %s163, 0
          %s169 = smul.addr %s22, 3
          %s170 = smul.addr %s169, 8
          %s171 = scalar_lea.hbm %s2, %s170
          %s172 = sshll.u32 %s171, 4
          %s173 = int_to_ptr.hbm [resolvable:$true] %s172
          %s174 = sshll.u32 %s166, 4
          %s175 = int_to_ptr.vmem [resolvable:$true] %s174
          %180 = dma.hbm_to_vmem [thread:$0]  %s173, 384, %s175, %s163, 128, 128, 8
        $region28: #{tpu_custom_call.1} parent=23 // pred_fallthru
          _
      $region24: #{tpu_custom_call.1} parent=5 // pred_fallthru
        _
      %p181 = scmp.le.s32.totalorder 1, %s15
      %p182 = scmp.lt.s32.totalorder %s15, 3
      %p183 = pnand %p181, %p182
      %p184 = pneg %p183
      // Predicated region
      $region29: #{tpu_custom_call.1} parent=5 // pred_check
        _
      $region30: #{tpu_custom_call.1} parent=5 // pred_check_branch
        %186 = sbr.rel (%p183) target = $region32
      $region31: #{tpu_custom_call.1} parent=5 // pred_region
        %s187 = ssub.s32 %s15, 1
        %s188 = sand.u32 %s87, 1
        %s189 = scalar_lea.sflag [#allocation3], %s188
        %s190 = sand.u32 %s87, 1
        %s191 = smul.addr %s190, 24
        %s192 = scalar_lea.vmem [#allocation2], %s191
        // Predicated region
        $region33: #{tpu_custom_call.1} parent=31 // pred_check
          %p193 = pneg %p100
        $region34: #{tpu_custom_call.1} parent=31 // pred_check_branch
          %195 = sbr.rel (%p193) target = $region36
        $region35: #{tpu_custom_call.1} parent=31 // pred_region
          %197 = dma.done %s189, 384
        $region36: #{tpu_custom_call.1} parent=31 // pred_fallthru
          _
        %s198 = smul.u32 2, %s25
        %p199 = scmp.lt.s32.totalorder %s198, 1
        %s200 = scalar_select %p199, %s198, 1
        %s201 = smul.addr %s200, 8
        %s202 = scalar_lea.vmem %s0, %s201
        %p203 = pneg %p53
        %p204 = pneg %p50
        %p205 = pneg %p74
        %p206 = pneg %p71
        %s207 = sand.u32 %s87, 1
        %s208 = scalar_lea.sflag [#allocation3], %s207
        %s209 = sand.u32 %s87, 1
        %s210 = smul.addr %s209, 24
        %s211 = scalar_lea.vmem [#allocation2], %s210
        %p212 = pneg %p100
        %p213 = pneg %p97
        %p214 = pneg %p128
        %p215 = pneg %p125
        %s216 = sand.u32 %s115, 1
        %s217 = scalar_lea.sflag [#allocation4], %s216
        %s218 = sand.u32 %s115, 1
        %s219 = smul.addr %s218, 48
        %s220 = scalar_lea.vmem [#allocation5], %s219
        %s221 = smul.u32 2, %s25
        %p222 = scmp.lt.s32.totalorder %s221, 1
        %s223 = scalar_select %p222, %s221, 1
        %s224 = smul.addr %s223, 8
        %s225 = scalar_lea.vmem %s0, %s224
        %s226 = smul.u32 2, %s25
        %s227 = smul.u32 2, %s25
        %v228 = vld [vmem:[%s225] sm:$0xff]
        %v229 = vld [vmem:[%s225 + $0x8] sm:$0xff]
        %v230 = vld [vmem:[%s1] sm:$0xff]
        %v231 = vld [vmem:[%s192] sm:$0xff]
        %vm232 = vcmask 64512
        %v234 = vsel %vm232, %v228, 0
        %v237 = vsel %vm232, %v229, 0
        %239 = vmatpush.msra.mxu0 0.0
        %240 = vmatpush.msra.mxu0 0.0
        %241 = vmatpush.msra.mxu0 0.0
        %242 = vmatpush.msra.mxu0 0.0
        %243 = vmatpush.msra.mxu0 0.0
        %244 = vmatpush.msra.mxu0 0.0
        %245 = vmatpush.msra.mxu0 0.0
        %246 = vmatpush.msra.mxu0 0.0
        %247 = vmatpush.msra.mxu0 0.0
        %248 = vmatpush.msra.mxu0 0.0
        %249 = vmatpush.msra.mxu0 0.0
        %250 = vmatpush.msra.mxu0 0.0
        %251 = vmatpush.msra.mxu0 0.0
        %252 = vmatpush.msra.mxu0 0.0
        %253 = vmatpush.msra.mxu0 0.0
        %254 = vmatpush.msra.mxu0 %v231
        %255 = vmatmul.f32.gmra.mxu0 %v234
        %v256 = vpop.f32.mrf.mxu0
        %v257 = vadd.f32 0.0, %v256
        %258 = vmatmul.f32.gmra.mxu0 %v237
        %v259 = vpop.f32.mrf.mxu0
        %v260 = vadd.f32 0.0, %v259
        %261 = vdwg.mxu0
        %v263 = vsel %vm232, %v257, 0
        %v266 = vsel %vm232, %v260, 0
        %268 = vmatpush.msra.mxu0 0.0
        %269 = vmatpush.msra.mxu0 0.0
        %270 = vmatpush.msra.mxu0 0.0
        %271 = vmatpush.msra.mxu0 0.0
        %272 = vmatpush.msra.mxu0 0.0
        %273 = vmatpush.msra.mxu0 0.0
        %274 = vmatpush.msra.mxu0 0.0
        %275 = vmatpush.msra.mxu0 0.0
        %276 = vmatpush.msra.mxu0 0.0
        %277 = vmatpush.msra.mxu0 0.0
        %278 = vmatpush.msra.mxu0 0.0
        %279 = vmatpush.msra.mxu0 0.0
        %280 = vmatpush.msra.mxu0 0.0
        %281 = vmatpush.msra.mxu0 0.0
        %282 = vmatpush.msra.mxu0 0.0
        %283 = vmatpush.msra.mxu0 %v230
        %284 = vmatmul.f32.gmra.mxu0 %v263
        %v285 = vpop.f32.mrf.mxu0
        %v286 = vadd.f32 0.0, %v285
        %287 = vmatmul.f32.gmra.mxu0 %v266
        %v288 = vpop.f32.mrf.mxu0
        %v289 = vadd.f32 0.0, %v288
        %290 = vdwg.mxu0
        %vm291 = vcmask 130048
        %292 = vst.msk [vmem:[%s220] sm:$0xff] %vm291, %v286
        %293 = vst.msk [vmem:[%s220 + $0x8] sm:$0xff] %vm291, %v289
        %s294 = scalar_lea.vmem %s192, 8 [#allocation2]
        %v295 = vld [vmem:[%s294] sm:$0xff]
        %296 = vmatpush.msra.mxu0 0.0
        %297 = vmatpush.msra.mxu0 0.0
        %298 = vmatpush.msra.mxu0 0.0
        %299 = vmatpush.msra.mxu0 0.0
        %300 = vmatpush.msra.mxu0 0.0
        %301 = vmatpush.msra.mxu0 0.0
        %302 = vmatpush.msra.mxu0 0.0
        %303 = vmatpush.msra.mxu0 0.0
        %304 = vmatpush.msra.mxu0 0.0
        %305 = vmatpush.msra.mxu0 0.0
        %306 = vmatpush.msra.mxu0 0.0
        %307 = vmatpush.msra.mxu0 0.0
        %308 = vmatpush.msra.mxu0 0.0
        %309 = vmatpush.msra.mxu0 0.0
        %310 = vmatpush.msra.mxu0 0.0
        %311 = vmatpush.msra.mxu0 %v295
        %312 = vmatmul.f32.gmra.mxu0 %v234
        %v313 = vpop.f32.mrf.mxu0
        %v314 = vadd.f32 0.0, %v313
        %315 = vmatmul.f32.gmra.mxu0 %v237
        %v316 = vpop.f32.mrf.mxu0
        %v317 = vadd.f32 0.0, %v316
        %318 = vdwg.mxu0
        %v320 = vsel %vm232, %v314, 0
        %v323 = vsel %vm232, %v317, 0
        %325 = vmatpush.msra.mxu0 0.0
        %326 = vmatpush.msra.mxu0 0.0
        %327 = vmatpush.msra.mxu0 0.0
        %328 = vmatpush.msra.mxu0 0.0
        %329 = vmatpush.msra.mxu0 0.0
        %330 = vmatpush.msra.mxu0 0.0
        %331 = vmatpush.msra.mxu0 0.0
        %332 = vmatpush.msra.mxu0 0.0
        %333 = vmatpush.msra.mxu0 0.0
        %334 = vmatpush.msra.mxu0 0.0
        %335 = vmatpush.msra.mxu0 0.0
        %336 = vmatpush.msra.mxu0 0.0
        %337 = vmatpush.msra.mxu0 0.0
        %338 = vmatpush.msra.mxu0 0.0
        %339 = vmatpush.msra.mxu0 0.0
        %340 = vmatpush.msra.mxu0 %v230
        %341 = vmatmul.f32.gmra.mxu0 %v320
        %v342 = vpop.f32.mrf.mxu0
        %v343 = vadd.f32 0.0, %v342
        %344 = vmatmul.f32.gmra.mxu0 %v323
        %v345 = vpop.f32.mrf.mxu0
        %v346 = vadd.f32 0.0, %v345
        %347 = vdwg.mxu0
        %s348 = scalar_lea.vmem %s220, 16 [#allocation5]
        %349 = vst.msk [vmem:[%s348] sm:$0xff] %vm291, %v343
        %350 = vst.msk [vmem:[%s348 + $0x8] sm:$0xff] %vm291, %v346
        %s351 = scalar_lea.vmem %s192, 16 [#allocation2]
        %v352 = vld [vmem:[%s351] sm:$0xff]
        %353 = vmatpush.msra.mxu0 0.0
        %354 = vmatpush.msra.mxu0 0.0
        %355 = vmatpush.msra.mxu0 0.0
        %356 = vmatpush.msra.mxu0 0.0
        %357 = vmatpush.msra.mxu0 0.0
        %358 = vmatpush.msra.mxu0 0.0
        %359 = vmatpush.msra.mxu0 0.0
        %360 = vmatpush.msra.mxu0 0.0
        %361 = vmatpush.msra.mxu0 0.0
        %362 = vmatpush.msra.mxu0 0.0
        %363 = vmatpush.msra.mxu0 0.0
        %364 = vmatpush.msra.mxu0 0.0
        %365 = vmatpush.msra.mxu0 0.0
        %366 = vmatpush.msra.mxu0 0.0
        %367 = vmatpush.msra.mxu0 0.0
        %368 = vmatpush.msra.mxu0 %v352
        %369 = vmatmul.f32.gmra.mxu0 %v234
        %v370 = vpop.f32.mrf.mxu0
        %v371 = vadd.f32 0.0, %v370
        %372 = vmatmul.f32.gmra.mxu0 %v237
        %v373 = vpop.f32.mrf.mxu0
        %v374 = vadd.f32 0.0, %v373
        %375 = vdwg.mxu0
        %v377 = vsel %vm232, %v371, 0
        %v380 = vsel %vm232, %v374, 0
        %382 = vmatpush.msra.mxu0 0.0
        %383 = vmatpush.msra.mxu0 0.0
        %384 = vmatpush.msra.mxu0 0.0
        %385 = vmatpush.msra.mxu0 0.0
        %386 = vmatpush.msra.mxu0 0.0
        %387 = vmatpush.msra.mxu0 0.0
        %388 = vmatpush.msra.mxu0 0.0
        %389 = vmatpush.msra.mxu0 0.0
        %390 = vmatpush.msra.mxu0 0.0
        %391 = vmatpush.msra.mxu0 0.0
        %392 = vmatpush.msra.mxu0 0.0
        %393 = vmatpush.msra.mxu0 0.0
        %394 = vmatpush.msra.mxu0 0.0
        %395 = vmatpush.msra.mxu0 0.0
        %396 = vmatpush.msra.mxu0 0.0
        %397 = vmatpush.msra.mxu0 %v230
        %398 = vmatmul.f32.gmra.mxu0 %v377
        %v399 = vpop.f32.mrf.mxu0
        %v400 = vadd.f32 0.0, %v399
        %401 = vmatmul.f32.gmra.mxu0 %v380
        %v402 = vpop.f32.mrf.mxu0
        %v403 = vadd.f32 0.0, %v402
        %404 = vdwg.mxu0
        %s405 = scalar_lea.vmem %s220, 32 [#allocation5]
        %406 = vst.msk [vmem:[%s405] sm:$0xff] %vm291, %v400
        %407 = vst.msk [vmem:[%s405 + $0x8] sm:$0xff] %vm291, %v403
        %s408 = sand.u32 %s115, 1
        %s409 = scalar_lea.sflag [#allocation4], %s408
        %s410 = sand.u32 %s115, 1
        %s411 = smul.addr %s410, 48
        %s412 = scalar_lea.vmem [#allocation5], %s411
        // Predicated region
        $region37: #{tpu_custom_call.1} parent=31 // pred_check
          %p413 = pneg %p125
        $region38: #{tpu_custom_call.1} parent=31 // pred_check_branch
          %415 = sbr.rel (%p413) target = $region40
        $region39: #{tpu_custom_call.1} parent=31 // pred_region
          %s416 = smul.u32 2, %s25
          %418 = vsyncadd %s409, 0
          %s419 = smul.addr %s24, 6
          %s420 = sadd.s32 %s416, %s419
          %s421 = smul.addr %s420, 8
          %s422 = scalar_lea.hbm %s3, %s421
          %s423 = sshll.u32 %s412, 4
          %s424 = int_to_ptr.vmem [resolvable:$true] %s423
          %s425 = sshll.u32 %s422, 4
          %s426 = int_to_ptr.hbm [resolvable:$true] %s425
          %431 = dma.vmem_to_hbm [thread:$0]  %s424, 768, %s426, %s409, 128, 128, 8
        $region40: #{tpu_custom_call.1} parent=31 // pred_fallthru
          _
      $region32: #{tpu_custom_call.1} parent=5 // pred_fallthru
        _
      %p432 = scmp.le.s32.totalorder 2, %s15
      // Predicated region
      $region41: #{tpu_custom_call.1} parent=5 // pred_check
        %p433 = pneg %p432
      $region42: #{tpu_custom_call.1} parent=5 // pred_check_branch
        %435 = sbr.rel (%p433) target = $region44
      $region43: #{tpu_custom_call.1} parent=5 // pred_region
        %s436 = ssub.s32 %s15, 2
        // Predicated region
        $region45: #{tpu_custom_call.1} parent=43 // pred_check
          %p437 = pneg %p131
        $region46: #{tpu_custom_call.1} parent=43 // pred_check_branch
          %439 = sbr.rel (%p437) target = $region48
        $region47: #{tpu_custom_call.1} parent=43 // pred_region
          %s440 = sand.u32 %s116, 1
          %s441 = scalar_lea.sflag [#allocation4], %s440
          %s442 = sand.u32 %s116, 1
          %s443 = smul.addr %s442, 48
          %s444 = scalar_lea.vmem [#allocation5], %s443
          %446 = dma.done %s441, 768
        $region48: #{tpu_custom_call.1} parent=43 // pred_fallthru
          _
      $region44: #{tpu_custom_call.1} parent=5 // pred_fallthru
        _
    $region6: #{tpu_custom_call.1} parent=1 // loop_footer
      %s19 = sadd.s32 1, %s15
    $region7: #{tpu_custom_call.1} parent=1 // loop_footer_branch
      %14 = sbr.rel target = $region3
    $region8: #{tpu_custom_call.1} parent=1 // loop_exit
      _
    %447 = vsyncpa [#allocation3], 1
    %s448 = scalar_lea.sflag [#allocation3], 1
    %449 = vsyncpa %s448, 1
    %450 = vsyncpa [#allocation4], 1
    %s451 = scalar_lea.sflag [#allocation4], 1
    %452 = vsyncpa %s451, 1

</llo_original>
